<compile_context>
chip_gen: v5e
topology: v5e:2x2
jax: 0.10.0
libtpu: 0.0.40
codegen_flags: <defaults>
</compile_context>

<pallas_src>
import jax
import jax.numpy as jnp
from jax.experimental import pallas as pl
from jax.experimental.pallas import tpu as pltpu

FRAME = 32            # synthetic frontend frame size (stand-in for WavLM conv stack)
WAVLM_DIM = 1024      # WavLM-Large hidden size
LIN_DIM = 128         # nn.Linear(1024, 128)
POOL_T, POOL_C = 4, 2
BN_CH = 50            # BatchNorm1d(50)  ->  requires T // POOL_T == 50
PACK = POOL_T * FRAME          # 128 waveform samples per pooled time step
OUT_CH = LIN_DIM // POOL_C     # 64 output channels

LN_EPS = 1e-5
BN_EPS = 1e-5
SELU_ALPHA = 1.6732632423543772
SELU_SCALE = 1.0507009873554805

_VMEM = pl.BlockSpec(memory_space=pltpu.MemorySpace.VMEM)


# --------------------------- fused forward kernel ---------------------------
def _fused_kernel(x_ref, w4_ref, b_ref, cs_ref, g_ref, beta_ref, o_ref):
    """x_ref:    (B*50, 128) f32   raw waveform, 4 frames of one pool window per row
       w4_ref:   (128, 512)  bf16  folded block-diagonal projection (cols permuted)
       b_ref:    (1, 128)    f32   folded bias (permuted)
       cs_ref:   (1, 128)    f32   per-channel column sums of w_comb (permuted)
       g_ref:    (50, 1)     f32   BatchNorm1d(50) gamma
       beta_ref: (50, 1)     f32   BatchNorm1d(50) beta
       o_ref:    (50, B*64)  f32   lane-dense output (batch b in lanes b*64..b*64+63)
    """
    TP = BN_CH
    B = x_ref.shape[0] // TP

    x = x_ref[...]                                    # (B*50, 128) f32, loaded once
    n = float(x.size)

    # ---- 1) F.layer_norm(x, x.shape): single-pass whole-tensor statistics ----
    s1 = jnp.sum(x)
    s2 = jnp.sum(x * x)
    mean = s1 / n
    var = jnp.maximum(s2 / n - mean * mean, 0.0)
    inv = jax.lax.rsqrt(var + LN_EPS)

    # ---- 2+3) folded projection on RAW bf16 input (overlaps the LN reduction) ----
    eb = jnp.dot(x.astype(jnp.bfloat16), w4_ref[...],
                 preferred_element_type=jnp.float32)  # (B*50, 512) f32

    # ---- 4a) time-axis pool: max over the 4 frame blocks (128-lane aligned) ----
    tmax = jnp.maximum(
        jnp.maximum(eb[:, 0:LIN_DIM], eb[:, LIN_DIM:2 * LIN_DIM]),
        jnp.maximum(eb[:, 2 * LIN_DIM:3 * LIN_DIM], eb[:, 3 * LIN_DIM:4 * LIN_DIM]))

    # LayerNorm as a post-max per-channel affine.  Exact because all diagonal
    # blocks of w4 are the identical w_comb and inv > 0 (affine commutes with max).
    off = b_ref[...] - (mean * inv) * cs_ref[...]     # (1, 128)
    m = inv * tmax + off                              # (B*50, 128)

    # ---- 4b) channel-pair pool: columns are permuted [even | odd], so pairing
    # lane c with lane c+64 is the (2c, 2c+1) max of the original channel order.
    cm = jnp.maximum(m, pltpu.roll(m, OUT_CH, axis=1))  # lanes c and c+64 are equal

    # ---- pack per-batch results into a lane-dense (50, B*64) slab ----
    if B == 2:
        # batch 0 -> lanes 0..63, batch 1 -> lanes 64..127 (uses cm's lane symmetry)
        lane = jax.lax.broadcasted_iota(jnp.int32, (TP, 2 * OUT_CH), 1)
        slab = jnp.where(lane < OUT_CH, cm[0:TP, :], cm[TP:2 * TP, :])
    else:
        slab = jnp.concatenate(
            [cm[b * TP:(b + 1) * TP, 0:OUT_CH] for b in range(B)], axis=1)

    # ---- 5) BatchNorm1d(50): training-mode (biased) batch stats per time step ----
    # TODO(synk): if the PyTorch module runs in eval() with running stats, swap in
    # running_mean/running_var here instead of batch statistics.
    cnt = float(B * OUT_CH)
    rs = jnp.sum(slab, axis=1, keepdims=True)                          # (50, 1)
    rs2 = jnp.sum(slab * slab, axis=1, keepdims=True)                  # (50, 1)
    ch_mean = rs / cnt
    ch_var = jnp.maximum(rs2 / cnt - ch_mean * ch_mean, 0.0)
    scale = g_ref[...] * jax.lax.rsqrt(ch_var + BN_EPS)                # (50, 1)
    shift = beta_ref[...] - ch_mean * scale                            # (50, 1)

    # ---- SELU + one unmasked lane-dense store ----
    y = slab * scale + shift                                           # (50, B*64)
    neg = SELU_ALPHA * (jnp.exp(jnp.minimum(y, 0.0)) - 1.0)            # exp clamped
    o_ref[...] = SELU_SCALE * jnp.where(y > 0, y, neg)


# ------------------------------ parameters ----------------------------------
def init_params():
    """Parameters mirroring the PyTorch module, pre-folded into kernel layout."""
    k1, k2, k3, k4 = jax.random.split(jax.random.PRNGKey(42), 4)
    w_feat = (jax.random.normal(k1, (FRAME, WAVLM_DIM), jnp.float32)
              / jnp.sqrt(float(FRAME)))
    b_feat = 0.02 * jax.random.normal(k2, (1, WAVLM_DIM), jnp.float32)
    w_lin = (jax.random.normal(k3, (WAVLM_DIM, LIN_DIM), jnp.float32)
             / jnp.sqrt(float(WAVLM_DIM)))
    b_lin = 0.02 * jax.random.normal(k4, (1, LIN_DIM), jnp.float32)

    # TODO(synk): folding is exact only for the linear WavLM stand-in.
    w_comb = w_feat @ w_lin                       # (32, 128)
    b_comb = b_feat @ w_lin + b_lin               # (1, 128)

    # Permute channels to [even | odd] so the channel-pair max-pool becomes a
    # 64-lane rotate + maximum inside the kernel.
    perm = jnp.concatenate([jnp.arange(0, LIN_DIM, 2), jnp.arange(1, LIN_DIM, 2)])
    w_comb = w_comb[:, perm]
    b_comb = b_comb[:, perm]

    # Quantize the weight once so the LN-fold colsum matches what the MXU sees.
    w_comb_bf16 = w_comb.astype(jnp.bfloat16)
    colsum = jnp.sum(w_comb_bf16.astype(jnp.float32), axis=0, keepdims=True)  # (1,128)

    # Block-diagonal expansion: each kernel row packs POOL_T consecutive frames,
    # block j maps frame j of the pooling window to its 128 channels (K=128).
    # TODO(synk): on v6e/v7x (256-deep MXU) repack two pool windows per row
    # (K=256) if the model grows; irrelevant at this ~13 MFLOP size.
    w4 = jnp.zeros((PACK, POOL_T * LIN_DIM), jnp.bfloat16)
    for j in range(POOL_T):
        w4 = w4.at[j * FRAME:(j + 1) * FRAME,
                   j * LIN_DIM:(j + 1) * LIN_DIM].set(w_comb_bf16)

    return {
        "w4": w4,                                         # (128, 512) bf16
        "b_comb": b_comb.astype(jnp.float32),             # (1, 128)
        "colsum": colsum.astype(jnp.float32),             # (1, 128)
        # PyTorch BatchNorm1d default init: weight = 1, bias = 0
        "bn_gamma": jnp.ones((BN_CH, 1), jnp.float32),
        "bn_beta": jnp.zeros((BN_CH, 1), jnp.float32),
    }


# ------------------------------- wrapper -------------------------------------
def wavlm_model_forward(x, params):
    B, L = x.shape
    T = L // FRAME
    assert T * FRAME == L and T % POOL_T == 0 and T // POOL_T == BN_CH, (
        "sequence length must give T // 4 == 50 to match BatchNorm1d(50)")
    t_pool = T // POOL_T

    # Free contiguous reshape: row (b*t_pool + t) holds the 4 frames of one window.
    xr = x.reshape(B * t_pool, PACK)

    out2d = pl.pallas_call(
        _fused_kernel,
        out_shape=jax.ShapeDtypeStruct((t_pool, B * OUT_CH), jnp.float32),
        in_specs=[_VMEM] * 6,
        out_specs=_VMEM,
    )(xr, params["w4"], params["b_comb"], params["colsum"],
      params["bn_gamma"], params["bn_beta"])

    # Split the lane-dense slab back into (B, 50, 64).
    return jnp.transpose(out2d.reshape(t_pool, B, OUT_CH), (1, 0, 2))


if __name__ == "__main__":
    B = 2
    L = BN_CH * POOL_T * FRAME    # 50 * 4 * 32 = 6400 samples -> T = 200 frames
    x = jax.random.normal(jax.random.PRNGKey(0), (B, L), jnp.float32)

    params = init_params()
    out = wavlm_model_forward(x, params)
    out = jax.block_until_ready(out)

    assert out.shape == (B, BN_CH, OUT_CH), out.shape
    assert out.dtype == jnp.float32
    assert bool(jnp.all(jnp.isfinite(out)))
    print("KERNEL_OK")
</pallas_src>

<mosaic_0001>
module attributes {stable_mosaic.version = 11 : i64} {
  func.func @_fused_kernel(%arg0: memref<100x128xf32, #tpu.memory_space<vmem>>, %arg1: memref<128x512xbf16, #tpu.memory_space<vmem>>, %arg2: memref<1x128xf32, #tpu.memory_space<vmem>>, %arg3: memref<1x128xf32, #tpu.memory_space<vmem>>, %arg4: memref<50x1xf32, #tpu.memory_space<vmem>>, %arg5: memref<50x1xf32, #tpu.memory_space<vmem>>, %arg6: memref<50x128xf32, #tpu.memory_space<vmem>>) attributes {dimension_semantics = [], scalar_prefetch = 0 : i64, scratch_operands = 0 : i64, tpu.core_type = #tpu.core_type<tc>} {
    %c0 = arith.constant 0 : index
    %c0_0 = arith.constant 0 : index
    %0 = vector.load %arg0[%c0, %c0_0] : memref<100x128xf32, #tpu.memory_space<vmem>>, vector<100x128xf32>
    %1 = vector.shape_cast %0 : vector<100x128xf32> to vector<1x100x128xf32>
    %cst = arith.constant dense<0.000000e+00> : vector<1xf32>
    %2 = vector.multi_reduction <add>, %1, %cst [1, 2] : vector<1x100x128xf32> to vector<1xf32>
    %3 = vector.shape_cast %2 : vector<1xf32> to vector<1x1x1xf32>
    %4 = vector.extract %3[0, 0, 0] : f32 from vector<1x1x1xf32>
    %5 = arith.mulf %0, %0 : vector<100x128xf32>
    %6 = vector.shape_cast %5 : vector<100x128xf32> to vector<1x100x128xf32>
    %cst_1 = arith.constant dense<0.000000e+00> : vector<1xf32>
    %7 = vector.multi_reduction <add>, %6, %cst_1 [1, 2] : vector<1x100x128xf32> to vector<1xf32>
    %8 = vector.shape_cast %7 : vector<1xf32> to vector<1x1x1xf32>
    %9 = vector.extract %8[0, 0, 0] : f32 from vector<1x1x1xf32>
    %cst_2 = arith.constant 1.280000e+04 : f32
    %10 = arith.divf %4, %cst_2 : f32
    %cst_3 = arith.constant 1.280000e+04 : f32
    %11 = arith.divf %9, %cst_3 : f32
    %12 = arith.mulf %10, %10 : f32
    %13 = arith.subf %11, %12 : f32
    %cst_4 = arith.constant 0.000000e+00 : f32
    %14 = arith.maximumf %13, %cst_4 : f32
    %cst_5 = arith.constant 9.99999974E-6 : f32
    %15 = arith.addf %14, %cst_5 : f32
    %16 = math.rsqrt %15 : f32
    %17 = arith.truncf %0 : vector<100x128xf32> to vector<100x128xbf16>
    %c0_6 = arith.constant 0 : index
    %c0_7 = arith.constant 0 : index
    %18 = vector.load %arg1[%c0_6, %c0_7] : memref<128x512xbf16, #tpu.memory_space<vmem>>, vector<128x512xbf16>
    %cst_8 = arith.constant dense<0.000000e+00> : vector<100x512xf32>
    %19 = tpu.matmul %17, %18, %cst_8 {dimension_numbers = #tpu.dot_dimension_numbers<[1], [0], [0], [1], [0, 0, 1, 1], [], []>} : vector<100x128xbf16>, vector<128x512xbf16>, vector<100x512xf32> -> vector<100x512xf32>
    %20 = vector.extract_strided_slice %19 {offsets = [0, 0], sizes = [100, 128], strides = [1, 1]} : vector<100x512xf32> to vector<100x128xf32>
    %21 = vector.extract_strided_slice %19 {offsets = [0, 128], sizes = [100, 128], strides = [1, 1]} : vector<100x512xf32> to vector<100x128xf32>
    %22 = arith.maximumf %20, %21 : vector<100x128xf32>
    %23 = vector.extract_strided_slice %19 {offsets = [0, 256], sizes = [100, 128], strides = [1, 1]} : vector<100x512xf32> to vector<100x128xf32>
    %24 = vector.extract_strided_slice %19 {offsets = [0, 384], sizes = [100, 128], strides = [1, 1]} : vector<100x512xf32> to vector<100x128xf32>
    %25 = arith.maximumf %23, %24 : vector<100x128xf32>
    %26 = arith.maximumf %22, %25 : vector<100x128xf32>
    %c0_9 = arith.constant 0 : index
    %c0_10 = arith.constant 0 : index
    %27 = vector.load %arg2[%c0_9, %c0_10] : memref<1x128xf32, #tpu.memory_space<vmem>>, vector<1x128xf32>
    %28 = arith.mulf %10, %16 : f32
    %c0_11 = arith.constant 0 : index
    %c0_12 = arith.constant 0 : index
    %29 = vector.load %arg3[%c0_11, %c0_12] : memref<1x128xf32, #tpu.memory_space<vmem>>, vector<1x128xf32>
    %30 = vector.broadcast %28 : f32 to vector<1x128xf32>
    %31 = arith.mulf %30, %29 : vector<1x128xf32>
    %32 = arith.subf %27, %31 : vector<1x128xf32>
    %33 = vector.broadcast %16 : f32 to vector<100x128xf32>
    %34 = arith.mulf %33, %26 : vector<100x128xf32>
    %35 = vector.broadcast %32 : vector<1x128xf32> to vector<100x128xf32>
    %36 = arith.addf %34, %35 : vector<100x128xf32>
    %c64_i32 = arith.constant 64 : i32
    %37 = tpu.dynamic_rotate %36 by %c64_i32 dim 1 : vector<100x128xf32>, i32 -> vector<100x128xf32>
    %38 = arith.maximumf %36, %37 : vector<100x128xf32>
    %39 = tpu.iota {dimensions = array<i32: 1>} : vector<50x128xi32>
    %c64_i32_13 = arith.constant 64 : i32
    %40 = vector.broadcast %c64_i32_13 : i32 to vector<50x128xi32>
    %41 = arith.cmpi slt, %39, %40 : vector<50x128xi32>
    %42 = vector.extract_strided_slice %38 {offsets = [0, 0], sizes = [50, 128], strides = [1, 1]} : vector<100x128xf32> to vector<50x128xf32>
    %43 = vector.extract_strided_slice %38 {offsets = [50, 0], sizes = [50, 128], strides = [1, 1]} : vector<100x128xf32> to vector<50x128xf32>
    %44 = arith.select %41, %42, %43 : vector<50x128xi1>, vector<50x128xf32>
    %cst_14 = arith.constant dense<0.000000e+00> : vector<50xf32>
    %45 = vector.multi_reduction <add>, %44, %cst_14 [1] : vector<50x128xf32> to vector<50xf32>
    %46 = vector.shape_cast %45 : vector<50xf32> to vector<50x1xf32>
    %47 = arith.mulf %44, %44 : vector<50x128xf32>
    %cst_15 = arith.constant dense<0.000000e+00> : vector<50xf32>
    %48 = vector.multi_reduction <add>, %47, %cst_15 [1] : vector<50x128xf32> to vector<50xf32>
    %49 = vector.shape_cast %48 : vector<50xf32> to vector<50x1xf32>
    %cst_16 = arith.constant 1.280000e+02 : f32
    %50 = vector.broadcast %cst_16 : f32 to vector<50x1xf32>
    %51 = arith.divf %46, %50 : vector<50x1xf32>
    %cst_17 = arith.constant 1.280000e+02 : f32
    %52 = vector.broadcast %cst_17 : f32 to vector<50x1xf32>
    %53 = arith.divf %49, %52 : vector<50x1xf32>
    %54 = arith.mulf %51, %51 : vector<50x1xf32>
    %55 = arith.subf %53, %54 : vector<50x1xf32>
    %cst_18 = arith.constant 0.000000e+00 : f32
    %56 = vector.broadcast %cst_18 : f32 to vector<50x1xf32>
    %57 = arith.maximumf %55, %56 : vector<50x1xf32>
    %c0_19 = arith.constant 0 : index
    %c0_20 = arith.constant 0 : index
    %58 = vector.load %arg4[%c0_19, %c0_20] : memref<50x1xf32, #tpu.memory_space<vmem>>, vector<50x1xf32>
    %cst_21 = arith.constant 9.99999974E-6 : f32
    %59 = vector.broadcast %cst_21 : f32 to vector<50x1xf32>
    %60 = arith.addf %57, %59 : vector<50x1xf32>
    %61 = math.rsqrt %60 : vector<50x1xf32>
    %62 = arith.mulf %58, %61 : vector<50x1xf32>
    %c0_22 = arith.constant 0 : index
    %c0_23 = arith.constant 0 : index
    %63 = vector.load %arg5[%c0_22, %c0_23] : memref<50x1xf32, #tpu.memory_space<vmem>>, vector<50x1xf32>
    %64 = arith.mulf %51, %62 : vector<50x1xf32>
    %65 = arith.subf %63, %64 : vector<50x1xf32>
    %66 = vector.broadcast %62 : vector<50x1xf32> to vector<50x128xf32>
    %67 = arith.mulf %44, %66 : vector<50x128xf32>
    %68 = vector.broadcast %65 : vector<50x1xf32> to vector<50x128xf32>
    %69 = arith.addf %67, %68 : vector<50x128xf32>
    %cst_24 = arith.constant 0.000000e+00 : f32
    %70 = vector.broadcast %cst_24 : f32 to vector<50x128xf32>
    %71 = arith.minimumf %69, %70 : vector<50x128xf32>
    %72 = math.exp %71 : vector<50x128xf32>
    %cst_25 = arith.constant 1.000000e+00 : f32
    %73 = vector.broadcast %cst_25 : f32 to vector<50x128xf32>
    %74 = arith.subf %72, %73 : vector<50x128xf32>
    %cst_26 = arith.constant 1.67326319 : f32
    %75 = vector.broadcast %cst_26 : f32 to vector<50x128xf32>
    %76 = arith.mulf %75, %74 : vector<50x128xf32>
    %cst_27 = arith.constant 0.000000e+00 : f32
    %77 = vector.broadcast %cst_27 : f32 to vector<50x128xf32>
    %78 = arith.cmpf ogt, %69, %77 : vector<50x128xf32>
    %79 = arith.select %78, %69, %76 : vector<50x128xi1>, vector<50x128xf32>
    %cst_28 = arith.constant 1.05070102 : f32
    %80 = vector.broadcast %cst_28 : f32 to vector<50x128xf32>
    %81 = arith.mulf %80, %79 : vector<50x128xf32>
    %c0_29 = arith.constant 0 : index
    %c0_30 = arith.constant 0 : index
    %82 = vector.load %arg6[%c0_29, %c0_30] : memref<50x128xf32, #tpu.memory_space<vmem>>, vector<50x128xf32>
    tpu.vector_store %arg6[%c0_29, %c0_30], %81 {strides = array<i32>} : memref<50x128xf32, #tpu.memory_space<vmem>>, vector<50x128xf32>,
    return
  }
}

</mosaic_0001>

<llo_original>
// kernel: tpu_custom_call.1
$region0: #{tpu_custom_call.1}
  #allocation0 [shape = 'u32[]', space=smem, size = 0x4, offset = 0x4, fixed_abs, tag = 'smem constant byte address 0x4 - core index']
  #allocation1 [shape = 'u32[72,128]{1,0:T(1,128)}', space=vmem, size = 0x9000, scoped, tag = 'internal scratch']
  %s0 = inlined_call_operand.vmem [shape: f32[100,128], index: 0, kind: input, shape index: {}]
  %s1 = inlined_call_operand.hbm [shape: bf16[128,512], index: 1, kind: input, shape index: {}]
  %s2 = inlined_call_operand.vmem [shape: f32[1,128], index: 2, kind: input, shape index: {}]
  %s3 = inlined_call_operand.vmem [shape: f32[1,128], index: 3, kind: input, shape index: {}]
  %s4 = inlined_call_operand.vmem [shape: f32[50,1], index: 4, kind: input, shape index: {}]
  %s5 = inlined_call_operand.vmem [shape: f32[50,1], index: 5, kind: input, shape index: {}]
  %s6 = inlined_call_operand.hbm [shape: f32[50,128], index: 6, kind: output, shape index: {}]
  %s7 = sld [smem:[#allocation0]]
  $region38: #{tpu_custom_call.1} parent=0
    _
  %s9 = ssub.s32 1, %s7
  %s10 = scalar_select 0, %s9, %s7
  $region1: #{tpu_custom_call.1} parent=0
    #allocation2 [shape = 'u8[131072]{0}', space=vmem, size = 0x20000, scoped, tag = 'input window, operand 1, single buffered']
    #allocation3 [shape = 's32[1]{0}', space=sflag, size = 0x4, scoped, tag = 'scoped memory for tpu_custom_call.1']
    #allocation4 [shape = 's32[1]{0}', space=sflag, size = 0x4, scoped, tag = 'scoped memory for tpu_custom_call.1']
    #allocation5 [shape = 'u8[28672]{0}', space=vmem, size = 0x7000, scoped, tag = 'output window, operand 0, single buffered']
    %11 = vsyncpa [#allocation3], 0
    %12 = vsyncpa [#allocation4], 0
    // Predicated region
    $region2: #{tpu_custom_call.1} parent=1 // pred_check
      _
    $region3: #{tpu_custom_call.1} parent=1 // pred_check_branch
      %14 = sbr.rel (0) target = $region5
    $region4: #{tpu_custom_call.1} parent=1 // pred_region
      _
    $region5: #{tpu_custom_call.1} parent=1 // pred_fallthru
      _
    // Predicated region
    $region6: #{tpu_custom_call.1} parent=1 // pred_check
      _
    $region7: #{tpu_custom_call.1} parent=1 // pred_check_branch
      %16 = sbr.rel (0) target = $region9
    $region8: #{tpu_custom_call.1} parent=1 // pred_region
      %18 = vsyncadd [#allocation3], 0
      %s19 = sshll.u32 %s1, 4
      %s20 = int_to_ptr.hbm [resolvable:$true] %s19
      %s21 = sshll.u32 [#allocation2], 4
      %s22 = int_to_ptr.vmem [resolvable:$true] %s21
      %27 = dma.hbm_to_vmem [thread:$0]  %s20, 4096, %s22, [#allocation3], 256, 256, 16
    $region9: #{tpu_custom_call.1} parent=1 // pred_fallthru
      _
    // Predicated region
    $region10: #{tpu_custom_call.1} parent=1 // pred_check
      _
    $region11: #{tpu_custom_call.1} parent=1 // pred_check_branch
      %29 = sbr.rel (0) target = $region13
    $region12: #{tpu_custom_call.1} parent=1 // pred_region
      _
    $region13: #{tpu_custom_call.1} parent=1 // pred_fallthru
      _
    // Predicated region
    $region14: #{tpu_custom_call.1} parent=1 // pred_check
      _
    $region15: #{tpu_custom_call.1} parent=1 // pred_check_branch
      %31 = sbr.rel (0) target = $region17
    $region16: #{tpu_custom_call.1} parent=1 // pred_region
      _
    $region17: #{tpu_custom_call.1} parent=1 // pred_fallthru
      _
    // Predicated region
    $region18: #{tpu_custom_call.1} parent=1 // pred_check
      _
    $region19: #{tpu_custom_call.1} parent=1 // pred_check_branch
      %33 = sbr.rel (0) target = $region21
    $region20: #{tpu_custom_call.1} parent=1 // pred_region
      _
    $region21: #{tpu_custom_call.1} parent=1 // pred_fallthru
      _
    // Predicated region
    $region22: #{tpu_custom_call.1} parent=1 // pred_check
      _
    $region23: #{tpu_custom_call.1} parent=1 // pred_check_branch
      %35 = sbr.rel (0) target = $region25
    $region24: #{tpu_custom_call.1} parent=1 // pred_region
      _
    $region25: #{tpu_custom_call.1} parent=1 // pred_fallthru
      _
    // Predicated region
    $region26: #{tpu_custom_call.1} parent=1 // pred_check
      _
    $region27: #{tpu_custom_call.1} parent=1 // pred_check_branch
      %37 = sbr.rel (0) target = $region29
    $region28: #{tpu_custom_call.1} parent=1 // pred_region
      %39 = dma.done [#allocation3], 4096
    $region29: #{tpu_custom_call.1} parent=1 // pred_fallthru
      _
    %v40 = vld [vmem:[%s0] sm:$0xff]
    %v41 = vld [vmem:[%s0 + $0x8] sm:$0xff]
    %v42 = vld [vmem:[%s0 + $0x10] sm:$0xff]
    %v43 = vld [vmem:[%s0 + $0x18] sm:$0xff]
    %v44 = vld [vmem:[%s0 + $0x20] sm:$0xff]
    %v45 = vld [vmem:[%s0 + $0x28] sm:$0xff]
    %v46 = vld [vmem:[%s0 + $0x30] sm:$0xff]
    %v47 = vld [vmem:[%s0 + $0x38] sm:$0xff]
    %v48 = vld [vmem:[%s0 + $0x40] sm:$0xff]
    %v49 = vld [vmem:[%s0 + $0x48] sm:$0xff]
    %v50 = vld [vmem:[%s0 + $0x50] sm:$0xff]
    %v51 = vld [vmem:[%s0 + $0x58] sm:$0xff]
    %v52 = vld [vmem:[%s0 + $0x60] sm:$0xf]
    %v53 = vadd.f32 %v40, %v41
    %v54 = vadd.f32 %v53, %v42
    %v55 = vadd.f32 %v54, %v43
    %v56 = vadd.f32 %v55, %v44
    %v57 = vadd.f32 %v56, %v45
    %v58 = vadd.f32 %v57, %v46
    %v59 = vadd.f32 %v58, %v47
    %v60 = vadd.f32 %v59, %v48
    %v61 = vadd.f32 %v60, %v49
    %v62 = vadd.f32 %v61, %v50
    %v63 = vadd.f32 %v62, %v51
    %vm64 = vcmask 1043456
    %v65 = vsel %vm64, %v52, 0.0
    %v66 = vadd.f32 %v63, %v65
    %67 = vadd.xlane.f32.xlu0 %v66
    %v68 = vpop.xlane.xlu0 %67
    %v69 = vrot.slane %v68, 4
    %v70 = vadd.f32 %v68, %v69
    %v71 = vrot.slane %v70, 2
    %v72 = vadd.f32 %v70, %v71
    %v73 = vrot.slane %v72, 1
    %v74 = vadd.f32 %v72, %v73
    %s75 = vtos %v74
    %v76 = vmul.f32 %v40, %v40
    %v77 = vmul.f32 %v41, %v41
    %v78 = vmul.f32 %v42, %v42
    %v79 = vmul.f32 %v43, %v43
    %v80 = vmul.f32 %v44, %v44
    %v81 = vmul.f32 %v45, %v45
    %v82 = vmul.f32 %v46, %v46
    %v83 = vmul.f32 %v47, %v47
    %v84 = vmul.f32 %v48, %v48
    %v85 = vmul.f32 %v49, %v49
    %v86 = vmul.f32 %v50, %v50
    %v87 = vmul.f32 %v51, %v51
    %v88 = vmul.f32 %v52, %v52
    %v89 = vadd.f32 %v76, %v77
    %v90 = vadd.f32 %v89, %v78
    %v91 = vadd.f32 %v90, %v79
    %v92 = vadd.f32 %v91, %v80
    %v93 = vadd.f32 %v92, %v81
    %v94 = vadd.f32 %v93, %v82
    %v95 = vadd.f32 %v94, %v83
    %v96 = vadd.f32 %v95, %v84
    %v97 = vadd.f32 %v96, %v85
    %v98 = vadd.f32 %v97, %v86
    %v99 = vadd.f32 %v98, %v87
    %v100 = vsel %vm64, %v88, 0.0
    %v101 = vadd.f32 %v99, %v100
    %102 = vadd.xlane.f32.xlu0 %v101
    %v103 = vpop.xlane.xlu0 %102
    %v104 = vrot.slane %v103, 4
    %v105 = vadd.f32 %v103, %v104
    %v106 = vrot.slane %v105, 2
    %v107 = vadd.f32 %v105, %v106
    %v108 = vrot.slane %v107, 1
    %v109 = vadd.f32 %v107, %v108
    %s110 = vtos %v109
    %v111 = vrcp.pop 12800.0
    %v112 = vmul.f32 12800.0, %v111
    %v113 = vsub.f32 1.0, %v112
    %v114 = vmul.f32 %v111, %v113
    %v115 = vadd.f32 %v111, %v114
    %vm116 = vweird.f32 %v111
    %v117 = vsel %vm116, %v111, %v115
    %s118 = vtos %v117
    %s119 = smul.f32 %s75, %s118
    %v120 = vrcp.pop 12800.0
    %v121 = vmul.f32 12800.0, %v120
    %v122 = vsub.f32 1.0, %v121
    %v123 = vmul.f32 %v120, %v122
    %v124 = vadd.f32 %v120, %v123
    %vm125 = vweird.f32 %v120
    %v126 = vsel %vm125, %v120, %v124
    %s127 = vtos %v126
    %s128 = smul.f32 %s110, %s127
    %s129 = smul.f32 %s119, %s119
    %s130 = ssub.f32 %s128, %s129
    %s131 = smax.f32 %s130, 0.0
    %s132 = sadd.f32 %s131, 1e-05
    %v133 = vstv %s132
    %v134 = vrsqrt.pop %v133
    %v135 = vmul.f32 %v134, %v133
    %v136 = vmul.f32 %v135, %v134
    %v137 = vmul.f32 0.5, %v136
    %v138 = vsub.f32 1.5, %v137
    %v139 = vmul.f32 %v134, %v138
    %vm140 = vweird.f32 %v133
    %vm141 = vweird.f32 %v134
    %vm142 = vmor %vm140, %vm141
    %v143 = vsel %vm142, %v134, %v139
    %s144 = vtos %v143
    %v145 = vpack.c.bf16 %v41, %v40
    %v146 = vpack.c.bf16 %v43, %v42
    %v147 = vpack.c.bf16 %v45, %v44
    %v148 = vpack.c.bf16 %v47, %v46
    %v149 = vpack.c.bf16 %v49, %v48
    %v150 = vpack.c.bf16 %v51, %v50
    %v151 = vpack.c.bf16 %v52, %v52
    %v152 = vld [vmem:[#allocation2] sm:$0xff]
    %v153 = vld [vmem:[#allocation2 + $0x8] sm:$0xff]
    %v154 = vld [vmem:[#allocation2 + $0x10] sm:$0xff]
    %v155 = vld [vmem:[#allocation2 + $0x18] sm:$0xff]
    %v156 = vld [vmem:[#allocation2 + $0x20] sm:$0xff]
    %v157 = vld [vmem:[#allocation2 + $0x28] sm:$0xff]
    %v158 = vld [vmem:[#allocation2 + $0x30] sm:$0xff]
    %v159 = vld [vmem:[#allocation2 + $0x38] sm:$0xff]
    %v160 = vld [vmem:[#allocation2 + $0x40] sm:$0xff]
    %v161 = vld [vmem:[#allocation2 + $0x48] sm:$0xff]
    %v162 = vld [vmem:[#allocation2 + $0x50] sm:$0xff]
    %v163 = vld [vmem:[#allocation2 + $0x58] sm:$0xff]
    %v164 = vld [vmem:[#allocation2 + $0x60] sm:$0xff]
    %v165 = vld [vmem:[#allocation2 + $0x68] sm:$0xff]
    %v166 = vld [vmem:[#allocation2 + $0x70] sm:$0xff]
    %v167 = vld [vmem:[#allocation2 + $0x78] sm:$0xff]
    %v168 = vld [vmem:[#allocation2 + $0x80] sm:$0xff]
    %v169 = vld [vmem:[#allocation2 + $0x88] sm:$0xff]
    %v170 = vld [vmem:[#allocation2 + $0x90] sm:$0xff]
    %v171 = vld [vmem:[#allocation2 + $0x98] sm:$0xff]
    %v172 = vld [vmem:[#allocation2 + $0xa0] sm:$0xff]
    %v173 = vld [vmem:[#allocation2 + $0xa8] sm:$0xff]
    %v174 = vld [vmem:[#allocation2 + $0xb0] sm:$0xff]
    %v175 = vld [vmem:[#allocation2 + $0xb8] sm:$0xff]
    %v176 = vld [vmem:[#allocation2 + $0xc0] sm:$0xff]
    %v177 = vld [vmem:[#allocation2 + $0xc8] sm:$0xff]
    %v178 = vld [vmem:[#allocation2 + $0xd0] sm:$0xff]
    %v179 = vld [vmem:[#allocation2 + $0xd8] sm:$0xff]
    %v180 = vld [vmem:[#allocation2 + $0xe0] sm:$0xff]
    %v181 = vld [vmem:[#allocation2 + $0xe8] sm:$0xff]
    %v182 = vld [vmem:[#allocation2 + $0xf0] sm:$0xff]
    %v183 = vld [vmem:[#allocation2 + $0xf8] sm:$0xff]
    %v216 = vunpack.c.l.b16 %v152
    %v217 = vunpack.c.h.b16 %v152
    %v218 = vunpack.c.l.b16 %v153
    %v219 = vunpack.c.h.b16 %v153
    %v220 = vunpack.c.l.b16 %v154
    %v221 = vunpack.c.h.b16 %v154
    %v222 = vunpack.c.l.b16 %v155
    %v223 = vunpack.c.h.b16 %v155
    %v224 = vunpack.c.l.b16 %v156
    %v225 = vunpack.c.h.b16 %v156
    %v226 = vunpack.c.l.b16 %v157
    %v227 = vunpack.c.h.b16 %v157
    %v228 = vunpack.c.l.b16 %v158
    %v229 = vunpack.c.h.b16 %v158
    %v230 = vunpack.c.l.b16 %v159
    %v231 = vunpack.c.h.b16 %v159
    %v232 = vunpack.c.l.b16 %v160
    %v233 = vunpack.c.h.b16 %v160
    %v234 = vunpack.c.l.b16 %v161
    %v235 = vunpack.c.h.b16 %v161
    %v236 = vunpack.c.l.b16 %v162
    %v237 = vunpack.c.h.b16 %v162
    %v238 = vunpack.c.l.b16 %v163
    %v239 = vunpack.c.h.b16 %v163
    %v240 = vunpack.c.l.b16 %v164
    %v241 = vunpack.c.h.b16 %v164
    %v242 = vunpack.c.l.b16 %v165
    %v243 = vunpack.c.h.b16 %v165
    %v244 = vunpack.c.l.b16 %v166
    %v245 = vunpack.c.h.b16 %v166
    %v246 = vunpack.c.l.b16 %v167
    %v247 = vunpack.c.h.b16 %v167
    %v248 = vunpack.c.l.b16 %v168
    %v249 = vunpack.c.h.b16 %v168
    %v250 = vunpack.c.l.b16 %v169
    %v251 = vunpack.c.h.b16 %v169
    %v252 = vunpack.c.l.b16 %v170
    %v253 = vunpack.c.h.b16 %v170
    %v254 = vunpack.c.l.b16 %v171
    %v255 = vunpack.c.h.b16 %v171
    %v256 = vunpack.c.l.b16 %v172
    %v257 = vunpack.c.h.b16 %v172
    %v258 = vunpack.c.l.b16 %v173
    %v259 = vunpack.c.h.b16 %v173
    %v260 = vunpack.c.l.b16 %v174
    %v261 = vunpack.c.h.b16 %v174
    %v262 = vunpack.c.l.b16 %v175
    %v263 = vunpack.c.h.b16 %v175
    %v264 = vunpack.c.l.b16 %v176
    %v265 = vunpack.c.h.b16 %v176
    %v266 = vunpack.c.l.b16 %v177
    %v267 = vunpack.c.h.b16 %v177
    %v268 = vunpack.c.l.b16 %v178
    %v269 = vunpack.c.h.b16 %v178
    %v270 = vunpack.c.l.b16 %v179
    %v271 = vunpack.c.h.b16 %v179
    %v272 = vunpack.c.l.b16 %v180
    %v273 = vunpack.c.h.b16 %v180
    %v274 = vunpack.c.l.b16 %v181
    %v275 = vunpack.c.h.b16 %v181
    %v276 = vunpack.c.l.b16 %v182
    %v277 = vunpack.c.h.b16 %v182
    %v278 = vunpack.c.l.b16 %v183
    %v279 = vunpack.c.h.b16 %v183
    %v280 = vpack.c.b16 %v220, %v216
    %v281 = vpack.c.b16 %v221, %v217
    %v282 = vpack.c.b16 %v222, %v218
    %v283 = vpack.c.b16 %v223, %v219
    %v284 = vpack.c.b16 %v228, %v224
    %v285 = vpack.c.b16 %v229, %v225
    %v286 = vpack.c.b16 %v230, %v226
    %v287 = vpack.c.b16 %v231, %v227
    %v288 = vpack.c.b16 %v236, %v232
    %v289 = vpack.c.b16 %v237, %v233
    %v290 = vpack.c.b16 %v238, %v234
    %v291 = vpack.c.b16 %v239, %v235
    %v292 = vpack.c.b16 %v244, %v240
    %v293 = vpack.c.b16 %v245, %v241
    %v294 = vpack.c.b16 %v246, %v242
    %v295 = vpack.c.b16 %v247, %v243
    %v296 = vpack.c.b16 %v252, %v248
    %v297 = vpack.c.b16 %v253, %v249
    %v298 = vpack.c.b16 %v254, %v250
    %v299 = vpack.c.b16 %v255, %v251
    %v300 = vpack.c.b16 %v260, %v256
    %v301 = vpack.c.b16 %v261, %v257
    %v302 = vpack.c.b16 %v262, %v258
    %v303 = vpack.c.b16 %v263, %v259
    %v304 = vpack.c.b16 %v268, %v264
    %v305 = vpack.c.b16 %v269, %v265
    %v306 = vpack.c.b16 %v270, %v266
    %v307 = vpack.c.b16 %v271, %v267
    %v308 = vpack.c.b16 %v276, %v272
    %v309 = vpack.c.b16 %v277, %v273
    %v310 = vpack.c.b16 %v278, %v274
    %v311 = vpack.c.b16 %v279, %v275
    %344 = vmatpush.bf16.msra.mxu0 %v308
    %345 = vmatpush.bf16.msra.mxu0 %v304
    %346 = vmatpush.bf16.msra.mxu0 %v300
    %347 = vmatpush.bf16.msra.mxu0 %v296
    %348 = vmatpush.bf16.msra.mxu0 %v292
    %349 = vmatpush.bf16.msra.mxu0 %v288
    %350 = vmatpush.bf16.msra.mxu0 %v284
    %351 = vmatpush.bf16.msra.mxu0 %v280
    %352 = vmatmul.bf16.gmra.mxu0 %v145
    %v353 = vpop.f32.mrf.mxu0
    %v354 = vadd.f32 0.0, %v353
    %v355 = vpop.f32.mrf.mxu0
    %v356 = vadd.f32 0.0, %v355
    %357 = vmatmul.bf16.gmra.mxu0 %v146
    %v358 = vpop.f32.mrf.mxu0
    %v359 = vadd.f32 0.0, %v358
    %v360 = vpop.f32.mrf.mxu0
    %v361 = vadd.f32 0.0, %v360
    %362 = vmatmul.bf16.gmra.mxu0 %v147
    %v363 = vpop.f32.mrf.mxu0
    %v364 = vadd.f32 0.0, %v363
    %v365 = vpop.f32.mrf.mxu0
    %v366 = vadd.f32 0.0, %v365
    %367 = vmatmul.bf16.gmra.mxu0 %v148
    %v368 = vpop.f32.mrf.mxu0
    %v369 = vadd.f32 0.0, %v368
    %v370 = vpop.f32.mrf.mxu0
    %v371 = vadd.f32 0.0, %v370
    %372 = vmatmul.bf16.gmra.mxu0 %v149
    %v373 = vpop.f32.mrf.mxu0
    %v374 = vadd.f32 0.0, %v373
    %v375 = vpop.f32.mrf.mxu0
    %v376 = vadd.f32 0.0, %v375
    %377 = vmatmul.bf16.gmra.mxu0 %v150
    %v378 = vpop.f32.mrf.mxu0
    %v379 = vadd.f32 0.0, %v378
    %v380 = vpop.f32.mrf.mxu0
    %v381 = vadd.f32 0.0, %v380
    %382 = vmatmul.bf16.gmra.mxu0 %v151
    %v383 = vpop.f32.mrf.mxu0
    %v384 = vadd.f32 0.0, %v383
    %v385 = vpop.f32.mrf.mxu0
    %386 = vdwg.mxu0
    %387 = vmatpush.bf16.msra.mxu0 %v309
    %388 = vmatpush.bf16.msra.mxu0 %v305
    %389 = vmatpush.bf16.msra.mxu0 %v301
    %390 = vmatpush.bf16.msra.mxu0 %v297
    %391 = vmatpush.bf16.msra.mxu0 %v293
    %392 = vmatpush.bf16.msra.mxu0 %v289
    %393 = vmatpush.bf16.msra.mxu0 %v285
    %394 = vmatpush.bf16.msra.mxu0 %v281
    %395 = vmatmul.bf16.gmra.mxu0 %v145
    %v396 = vpop.f32.mrf.mxu0
    %v397 = vadd.f32 0.0, %v396
    %v398 = vpop.f32.mrf.mxu0
    %v399 = vadd.f32 0.0, %v398
    %400 = vmatmul.bf16.gmra.mxu0 %v146
    %v401 = vpop.f32.mrf.mxu0
    %v402 = vadd.f32 0.0, %v401
    %v403 = vpop.f32.mrf.mxu0
    %v404 = vadd.f32 0.0, %v403
    %405 = vmatmul.bf16.gmra.mxu0 %v147
    %v406 = vpop.f32.mrf.mxu0
    %v407 = vadd.f32 0.0, %v406
    %v408 = vpop.f32.mrf.mxu0
    %v409 = vadd.f32 0.0, %v408
    %410 = vmatmul.bf16.gmra.mxu0 %v148
    %v411 = vpop.f32.mrf.mxu0
    %v412 = vadd.f32 0.0, %v411
    %v413 = vpop.f32.mrf.mxu0
    %v414 = vadd.f32 0.0, %v413
    %415 = vmatmul.bf16.gmra.mxu0 %v149
    %v416 = vpop.f32.mrf.mxu0
    %v417 = vadd.f32 0.0, %v416
    %v418 = vpop.f32.mrf.mxu0
    %v419 = vadd.f32 0.0, %v418
    %420 = vmatmul.bf16.gmra.mxu0 %v150
    %v421 = vpop.f32.mrf.mxu0
    %v422 = vadd.f32 0.0, %v421
    %v423 = vpop.f32.mrf.mxu0
    %v424 = vadd.f32 0.0, %v423
    %425 = vmatmul.bf16.gmra.mxu0 %v151
    %v426 = vpop.f32.mrf.mxu0
    %v427 = vadd.f32 0.0, %v426
    %v428 = vpop.f32.mrf.mxu0
    %429 = vdwg.mxu0
    %430 = vmatpush.bf16.msra.mxu0 %v310
    %431 = vmatpush.bf16.msra.mxu0 %v306
    %432 = vmatpush.bf16.msra.mxu0 %v302
    %433 = vmatpush.bf16.msra.mxu0 %v298
    %434 = vmatpush.bf16.msra.mxu0 %v294
    %435 = vmatpush.bf16.msra.mxu0 %v290
    %436 = vmatpush.bf16.msra.mxu0 %v286
    %437 = vmatpush.bf16.msra.mxu0 %v282
    %438 = vmatmul.bf16.gmra.mxu0 %v145
    %v439 = vpop.f32.mrf.mxu0
    %v440 = vadd.f32 0.0, %v439
    %v441 = vpop.f32.mrf.mxu0
    %v442 = vadd.f32 0.0, %v441
    %443 = vmatmul.bf16.gmra.mxu0 %v146
    %v444 = vpop.f32.mrf.mxu0
    %v445 = vadd.f32 0.0, %v444
    %v446 = vpop.f32.mrf.mxu0
    %v447 = vadd.f32 0.0, %v446
    %448 = vmatmul.bf16.gmra.mxu0 %v147
    %v449 = vpop.f32.mrf.mxu0
    %v450 = vadd.f32 0.0, %v449
    %v451 = vpop.f32.mrf.mxu0
    %v452 = vadd.f32 0.0, %v451
    %453 = vmatmul.bf16.gmra.mxu0 %v148
    %v454 = vpop.f32.mrf.mxu0
    %v455 = vadd.f32 0.0, %v454
    %v456 = vpop.f32.mrf.mxu0
    %v457 = vadd.f32 0.0, %v456
    %458 = vmatmul.bf16.gmra.mxu0 %v149
    %v459 = vpop.f32.mrf.mxu0
    %v460 = vadd.f32 0.0, %v459
    %v461 = vpop.f32.mrf.mxu0
    %v462 = vadd.f32 0.0, %v461
    %463 = vmatmul.bf16.gmra.mxu0 %v150
    %v464 = vpop.f32.mrf.mxu0
    %v465 = vadd.f32 0.0, %v464
    %v466 = vpop.f32.mrf.mxu0
    %v467 = vadd.f32 0.0, %v466
    %468 = vmatmul.bf16.gmra.mxu0 %v151
    %v469 = vpop.f32.mrf.mxu0
    %v470 = vadd.f32 0.0, %v469
    %v471 = vpop.f32.mrf.mxu0
    %472 = vdwg.mxu0
    %473 = vmatpush.bf16.msra.mxu0 %v311
    %474 = vmatpush.bf16.msra.mxu0 %v307
    %475 = vmatpush.bf16.msra.mxu0 %v303
    %476 = vmatpush.bf16.msra.mxu0 %v299
    %477 = vmatpush.bf16.msra.mxu0 %v295
    %478 = vmatpush.bf16.msra.mxu0 %v291
    %479 = vmatpush.bf16.msra.mxu0 %v287
    %480 = vmatpush.bf16.msra.mxu0 %v283
    %481 = vmatmul.bf16.gmra.mxu0 %v145
    %v482 = vpop.f32.mrf.mxu0
    %v483 = vadd.f32 0.0, %v482
    %v484 = vpop.f32.mrf.mxu0
    %v485 = vadd.f32 0.0, %v484
    %486 = vmatmul.bf16.gmra.mxu0 %v146
    %v487 = vpop.f32.mrf.mxu0
    %v488 = vadd.f32 0.0, %v487
    %v489 = vpop.f32.mrf.mxu0
    %v490 = vadd.f32 0.0, %v489
    %491 = vmatmul.bf16.gmra.mxu0 %v147
    %v492 = vpop.f32.mrf.mxu0
    %v493 = vadd.f32 0.0, %v492
    %v494 = vpop.f32.mrf.mxu0
    %v495 = vadd.f32 0.0, %v494
    %496 = vmatmul.bf16.gmra.mxu0 %v148
    %v497 = vpop.f32.mrf.mxu0
    %v498 = vadd.f32 0.0, %v497
    %v499 = vpop.f32.mrf.mxu0
    %v500 = vadd.f32 0.0, %v499
    %501 = vmatmul.bf16.gmra.mxu0 %v149
    %v502 = vpop.f32.mrf.mxu0
    %v503 = vadd.f32 0.0, %v502
    %v504 = vpop.f32.mrf.mxu0
    %v505 = vadd.f32 0.0, %v504
    %506 = vmatmul.bf16.gmra.mxu0 %v150
    %v507 = vpop.f32.mrf.mxu0
    %v508 = vadd.f32 0.0, %v507
    %v509 = vpop.f32.mrf.mxu0
    %v510 = vadd.f32 0.0, %v509
    %511 = vmatmul.bf16.gmra.mxu0 %v151
    %v512 = vpop.f32.mrf.mxu0
    %v513 = vadd.f32 0.0, %v512
    %v514 = vpop.f32.mrf.mxu0
    %515 = vdwg.mxu0
    %v516 = vmax.f32 %v354, %v397
    %v517 = vmax.f32 %v356, %v399
    %v518 = vmax.f32 %v359, %v402
    %v519 = vmax.f32 %v361, %v404
    %v520 = vmax.f32 %v364, %v407
    %v521 = vmax.f32 %v366, %v409
    %v522 = vmax.f32 %v369, %v412
    %v523 = vmax.f32 %v371, %v414
    %v524 = vmax.f32 %v374, %v417
    %v525 = vmax.f32 %v376, %v419
    %v526 = vmax.f32 %v379, %v422
    %v527 = vmax.f32 %v381, %v424
    %v528 = vmax.f32 %v384, %v427
    %v529 = vmax.f32 %v440, %v483
    %v530 = vmax.f32 %v442, %v485
    %v531 = vmax.f32 %v445, %v488
    %v532 = vmax.f32 %v447, %v490
    %v533 = vmax.f32 %v450, %v493
    %v534 = vmax.f32 %v452, %v495
    %v535 = vmax.f32 %v455, %v498
    %v536 = vmax.f32 %v457, %v500
    %v537 = vmax.f32 %v460, %v503
    %v538 = vmax.f32 %v462, %v505
    %v539 = vmax.f32 %v465, %v508
    %v540 = vmax.f32 %v467, %v510
    %v541 = vmax.f32 %v470, %v513
    %v542 = vmax.f32 %v516, %v529
    %v543 = vmax.f32 %v517, %v530
    %v544 = vmax.f32 %v518, %v531
    %v545 = vmax.f32 %v519, %v532
    %v546 = vmax.f32 %v520, %v533
    %v547 = vmax.f32 %v521, %v534
    %v548 = vmax.f32 %v522, %v535
    %v549 = vmax.f32 %v523, %v536
    %v550 = vmax.f32 %v524, %v537
    %v551 = vmax.f32 %v525, %v538
    %v552 = vmax.f32 %v526, %v539
    %v553 = vmax.f32 %v527, %v540
    %v554 = vmax.f32 %v528, %v541
    %v555 = vld [vmem:[%s2] sm:$0x1]
    %s556 = smul.f32 %s119, %s144
    %v557 = vld [vmem:[%s3] sm:$0x1]
    %v558 = vstv %s556
    %v559 = vmul.f32 %v558, %v557
    %v560 = vsub.f32 %v555, %v559
    %v561 = vstv %s144
    %v562 = vmul.f32 %v561, %v542
    %v563 = vmul.f32 %v561, %v543
    %v564 = vmul.f32 %v561, %v544
    %v565 = vmul.f32 %v561, %v545
    %v566 = vmul.f32 %v561, %v546
    %v567 = vmul.f32 %v561, %v547
    %v568 = vmul.f32 %v561, %v548
    %v569 = vmul.f32 %v561, %v549
    %v570 = vmul.f32 %v561, %v550
    %v571 = vmul.f32 %v561, %v551
    %v572 = vmul.f32 %v561, %v552
    %v573 = vmul.f32 %v561, %v553
    %v574 = vmul.f32 %v561, %v554
    %v576 = vperm.slane %v560, 0
    %v578 = vadd.f32 %v562, %v576
    %v579 = vadd.f32 %v563, %v576
    %v580 = vadd.f32 %v564, %v576
    %v581 = vadd.f32 %v565, %v576
    %v582 = vadd.f32 %v566, %v576
    %v583 = vadd.f32 %v567, %v576
    %v584 = vadd.f32 %v568, %v576
    %v585 = vadd.f32 %v569, %v576
    %v586 = vadd.f32 %v570, %v576
    %v587 = vadd.f32 %v571, %v576
    %v588 = vadd.f32 %v572, %v576
    %v589 = vadd.f32 %v573, %v576
    %v590 = vadd.f32 %v574, %v576
    %591 = vrot.lane.b32.xlu0 %v578, 64
    %v592 = vpop.permute.xlu0 %591
    %593 = vrot.lane.b32.xlu0 %v579, 64
    %v594 = vpop.permute.xlu0 %593
    %595 = vrot.lane.b32.xlu0 %v580, 64
    %v596 = vpop.permute.xlu0 %595
    %597 = vrot.lane.b32.xlu0 %v581, 64
    %v598 = vpop.permute.xlu0 %597
    %599 = vrot.lane.b32.xlu0 %v582, 64
    %v600 = vpop.permute.xlu0 %599
    %601 = vrot.lane.b32.xlu0 %v583, 64
    %v602 = vpop.permute.xlu0 %601
    %603 = vrot.lane.b32.xlu0 %v584, 64
    %v604 = vpop.permute.xlu0 %603
    %605 = vrot.lane.b32.xlu0 %v585, 64
    %v606 = vpop.permute.xlu0 %605
    %607 = vrot.lane.b32.xlu0 %v586, 64
    %v608 = vpop.permute.xlu0 %607
    %609 = vrot.lane.b32.xlu0 %v587, 64
    %v610 = vpop.permute.xlu0 %609
    %611 = vrot.lane.b32.xlu0 %v588, 64
    %v612 = vpop.permute.xlu0 %611
    %613 = vrot.lane.b32.xlu0 %v589, 64
    %v614 = vpop.permute.xlu0 %613
    %615 = vrot.lane.b32.xlu0 %v590, 64
    %v616 = vpop.permute.xlu0 %615
    %v617 = vmax.f32 %v578, %v592
    %v618 = vmax.f32 %v579, %v594
    %v619 = vmax.f32 %v580, %v596
    %v620 = vmax.f32 %v581, %v598
    %v621 = vmax.f32 %v582, %v600
    %v622 = vmax.f32 %v583, %v602
    %v623 = vmax.f32 %v584, %v604
    %v624 = vmax.f32 %v585, %v606
    %v625 = vmax.f32 %v586, %v608
    %v626 = vmax.f32 %v587, %v610
    %v627 = vmax.f32 %v588, %v612
    %v628 = vmax.f32 %v589, %v614
    %v629 = vmax.f32 %v590, %v616
    %v630 = vlaneseq
    %v631 = vand.u32 %v630, 127
    %vm632 = vcmp.lt.s32.totalorder %v631, 64
    %vm640 = vcmask 1045504
    %v641 = vrot.slane %v623, 2
    %v642 = vrot.slane %v624, 2
    %v643 = vsel %vm640, %v641, %v642
    %v644 = vrot.slane %v625, 2
    %v645 = vsel %vm640, %v642, %v644
    %v646 = vrot.slane %v626, 2
    %v647 = vsel %vm640, %v644, %v646
    %v648 = vrot.slane %v627, 2
    %v649 = vsel %vm640, %v646, %v648
    %v650 = vrot.slane %v628, 2
    %v651 = vsel %vm640, %v648, %v650
    %v652 = vrot.slane %v629, 2
    %v653 = vsel %vm640, %v650, %v652
    %v661 = vsel %vm632, %v617, %v643
    %v662 = vsel %vm632, %v618, %v645
    %v663 = vsel %vm632, %v619, %v647
    %v664 = vsel %vm632, %v620, %v649
    %v665 = vsel %vm632, %v621, %v651
    %v666 = vsel %vm632, %v622, %v653
    %v667 = vsel %vm632, %v623, %v652
    %668 = vadd.xlane.f32.xlu0 %v661
    %v669 = vpop.xlane.xlu0 %668
    %670 = vadd.xlane.f32.xlu0 %v662
    %v671 = vpop.xlane.xlu0 %670
    %672 = vadd.xlane.f32.xlu0 %v663
    %v673 = vpop.xlane.xlu0 %672
    %674 = vadd.xlane.f32.xlu0 %v664
    %v675 = vpop.xlane.xlu0 %674
    %676 = vadd.xlane.f32.xlu0 %v665
    %v677 = vpop.xlane.xlu0 %676
    %678 = vadd.xlane.f32.xlu0 %v666
    %v679 = vpop.xlane.xlu0 %678
    %vm680 = vcmask 1041408
    %v681 = vsel %vm680, %v667, 0.0
    %682 = vadd.xlane.f32.xlu0 %v681
    %v683 = vpop.xlane.xlu0 %682
    %v684 = vmul.f32 %v661, %v661
    %v685 = vmul.f32 %v662, %v662
    %v686 = vmul.f32 %v663, %v663
    %v687 = vmul.f32 %v664, %v664
    %v688 = vmul.f32 %v665, %v665
    %v689 = vmul.f32 %v666, %v666
    %v690 = vmul.f32 %v667, %v667
    %691 = vadd.xlane.f32.xlu0 %v684
    %v692 = vpop.xlane.xlu0 %691
    %693 = vadd.xlane.f32.xlu0 %v685
    %v694 = vpop.xlane.xlu0 %693
    %695 = vadd.xlane.f32.xlu0 %v686
    %v696 = vpop.xlane.xlu0 %695
    %697 = vadd.xlane.f32.xlu0 %v687
    %v698 = vpop.xlane.xlu0 %697
    %699 = vadd.xlane.f32.xlu0 %v688
    %v700 = vpop.xlane.xlu0 %699
    %701 = vadd.xlane.f32.xlu0 %v689
    %v702 = vpop.xlane.xlu0 %701
    %v703 = vsel %vm680, %v690, 0.0
    %704 = vadd.xlane.f32.xlu0 %v703
    %v705 = vpop.xlane.xlu0 %704
    %v706 = vrcp.pop 128.0
    %v707 = vmul.f32 128.0, %v706
    %v708 = vsub.f32 1.0, %v707
    %v709 = vmul.f32 %v706, %v708
    %v710 = vadd.f32 %v706, %v709
    %vm711 = vweird.f32 %v706
    %v712 = vsel %vm711, %v706, %v710
    %v713 = vmul.f32 %v669, %v712
    %v714 = vmul.f32 %v671, %v712
    %v715 = vmul.f32 %v673, %v712
    %v716 = vmul.f32 %v675, %v712
    %v717 = vmul.f32 %v677, %v712
    %v718 = vmul.f32 %v679, %v712
    %v719 = vmul.f32 %v683, %v712
    %v720 = vmul.f32 %v692, %v712
    %v721 = vmul.f32 %v694, %v712
    %v722 = vmul.f32 %v696, %v712
    %v723 = vmul.f32 %v698, %v712
    %v724 = vmul.f32 %v700, %v712
    %v725 = vmul.f32 %v702, %v712
    %v726 = vmul.f32 %v705, %v712
    %v727 = vmul.f32 %v713, %v713
    %v728 = vmul.f32 %v714, %v714
    %v729 = vmul.f32 %v715, %v715
    %v730 = vmul.f32 %v716, %v716
    %v731 = vmul.f32 %v717, %v717
    %v732 = vmul.f32 %v718, %v718
    %v733 = vmul.f32 %v719, %v719
    %v734 = vsub.f32 %v720, %v727
    %v735 = vsub.f32 %v721, %v728
    %v736 = vsub.f32 %v722, %v729
    %v737 = vsub.f32 %v723, %v730
    %v738 = vsub.f32 %v724, %v731
    %v739 = vsub.f32 %v725, %v732
    %v740 = vsub.f32 %v726, %v733
    %v741 = vmax.f32 %v734, 0.0
    %v742 = vmax.f32 %v735, 0.0
    %v743 = vmax.f32 %v736, 0.0
    %v744 = vmax.f32 %v737, 0.0
    %v745 = vmax.f32 %v738, 0.0
    %v746 = vmax.f32 %v739, 0.0
    %v747 = vmax.f32 %v740, 0.0
    %v748 = vld [vmem:[%s4] sm:$0xff]
    %v749 = vld [vmem:[%s4 + $0x8] sm:$0xff]
    %v750 = vld [vmem:[%s4 + $0x10] sm:$0xff]
    %v751 = vld [vmem:[%s4 + $0x18] sm:$0xff]
    %v752 = vld [vmem:[%s4 + $0x20] sm:$0xff]
    %v753 = vld [vmem:[%s4 + $0x28] sm:$0xff]
    %v754 = vld [vmem:[%s4 + $0x30] sm:$0x3]
    %v755 = vadd.f32 %v741, 1e-05
    %v756 = vadd.f32 %v742, 1e-05
    %v757 = vadd.f32 %v743, 1e-05
    %v758 = vadd.f32 %v744, 1e-05
    %v759 = vadd.f32 %v745, 1e-05
    %v760 = vadd.f32 %v746, 1e-05
    %v761 = vadd.f32 %v747, 1e-05
    %v762 = vrsqrt.pop %v755
    %v763 = vmul.f32 %v762, %v755
    %v764 = vmul.f32 %v763, %v762
    %v765 = vmul.f32 0.5, %v764
    %v766 = vsub.f32 1.5, %v765
    %v767 = vmul.f32 %v762, %v766
    %vm768 = vweird.f32 %v755
    %vm769 = vweird.f32 %v762
    %vm770 = vmor %vm768, %vm769
    %v771 = vsel %vm770, %v762, %v767
    %v772 = vrsqrt.pop %v756
    %v773 = vmul.f32 %v772, %v756
    %v774 = vmul.f32 %v773, %v772
    %v775 = vmul.f32 0.5, %v774
    %v776 = vsub.f32 1.5, %v775
    %v777 = vmul.f32 %v772, %v776
    %vm778 = vweird.f32 %v756
    %vm779 = vweird.f32 %v772
    %vm780 = vmor %vm778, %vm779
    %v781 = vsel %vm780, %v772, %v777
    %v782 = vrsqrt.pop %v757
    %v783 = vmul.f32 %v782, %v757
    %v784 = vmul.f32 %v783, %v782
    %v785 = vmul.f32 0.5, %v784
    %v786 = vsub.f32 1.5, %v785
    %v787 = vmul.f32 %v782, %v786
    %vm788 = vweird.f32 %v757
    %vm789 = vweird.f32 %v782
    %vm790 = vmor %vm788, %vm789
    %v791 = vsel %vm790, %v782, %v787
    %v792 = vrsqrt.pop %v758
    %v793 = vmul.f32 %v792, %v758
    %v794 = vmul.f32 %v793, %v792
    %v795 = vmul.f32 0.5, %v794
    %v796 = vsub.f32 1.5, %v795
    %v797 = vmul.f32 %v792, %v796
    %vm798 = vweird.f32 %v758
    %vm799 = vweird.f32 %v792
    %vm800 = vmor %vm798, %vm799
    %v801 = vsel %vm800, %v792, %v797
    %v802 = vrsqrt.pop %v759
    %v803 = vmul.f32 %v802, %v759
    %v804 = vmul.f32 %v803, %v802
    %v805 = vmul.f32 0.5, %v804
    %v806 = vsub.f32 1.5, %v805
    %v807 = vmul.f32 %v802, %v806
    %vm808 = vweird.f32 %v759
    %vm809 = vweird.f32 %v802
    %vm810 = vmor %vm808, %vm809
    %v811 = vsel %vm810, %v802, %v807
    %v812 = vrsqrt.pop %v760
    %v813 = vmul.f32 %v812, %v760
    %v814 = vmul.f32 %v813, %v812
    %v815 = vmul.f32 0.5, %v814
    %v816 = vsub.f32 1.5, %v815
    %v817 = vmul.f32 %v812, %v816
    %vm818 = vweird.f32 %v760
    %vm819 = vweird.f32 %v812
    %vm820 = vmor %vm818, %vm819
    %v821 = vsel %vm820, %v812, %v817
    %v822 = vrsqrt.pop %v761
    %v823 = vmul.f32 %v822, %v761
    %v824 = vmul.f32 %v823, %v822
    %v825 = vmul.f32 0.5, %v824
    %v826 = vsub.f32 1.5, %v825
    %v827 = vmul.f32 %v822, %v826
    %vm828 = vweird.f32 %v761
    %vm829 = vweird.f32 %v822
    %vm830 = vmor %vm828, %vm829
    %v831 = vsel %vm830, %v822, %v827
    %v832 = vmul.f32 %v748, %v771
    %v833 = vmul.f32 %v749, %v781
    %v834 = vmul.f32 %v750, %v791
    %v835 = vmul.f32 %v751, %v801
    %v836 = vmul.f32 %v752, %v811
    %v837 = vmul.f32 %v753, %v821
    %v838 = vmul.f32 %v754, %v831
    %v839 = vld [vmem:[%s5] sm:$0xff]
    %v840 = vld [vmem:[%s5 + $0x8] sm:$0xff]
    %v841 = vld [vmem:[%s5 + $0x10] sm:$0xff]
    %v842 = vld [vmem:[%s5 + $0x18] sm:$0xff]
    %v843 = vld [vmem:[%s5 + $0x20] sm:$0xff]
    %v844 = vld [vmem:[%s5 + $0x28] sm:$0xff]
    %v845 = vld [vmem:[%s5 + $0x30] sm:$0x3]
    %v846 = vmul.f32 %v713, %v832
    %v847 = vmul.f32 %v714, %v833
    %v848 = vmul.f32 %v715, %v834
    %v849 = vmul.f32 %v716, %v835
    %v850 = vmul.f32 %v717, %v836
    %v851 = vmul.f32 %v718, %v837
    %v852 = vmul.f32 %v719, %v838
    %v853 = vsub.f32 %v839, %v846
    %v854 = vsub.f32 %v840, %v847
    %v855 = vsub.f32 %v841, %v848
    %v856 = vsub.f32 %v842, %v849
    %v857 = vsub.f32 %v843, %v850
    %v858 = vsub.f32 %v844, %v851
    %v859 = vsub.f32 %v845, %v852
    %861 = vset.pattern.permute.xlu0 0
    %862 = vperm.xlu0 %861, %v832
    %v863 = vpop.permute.xlu0 %862
    %866 = vset.pattern.permute.xlu0 0
    %867 = vperm.xlu0 %866, %v833
    %v868 = vpop.permute.xlu0 %867
    %871 = vset.pattern.permute.xlu0 0
    %872 = vperm.xlu0 %871, %v834
    %v873 = vpop.permute.xlu0 %872
    %876 = vset.pattern.permute.xlu0 0
    %877 = vperm.xlu0 %876, %v835
    %v878 = vpop.permute.xlu0 %877
    %881 = vset.pattern.permute.xlu0 0
    %882 = vperm.xlu0 %881, %v836
    %v883 = vpop.permute.xlu0 %882
    %886 = vset.pattern.permute.xlu0 0
    %887 = vperm.xlu0 %886, %v837
    %v888 = vpop.permute.xlu0 %887
    %891 = vset.pattern.permute.xlu0 0
    %892 = vperm.xlu0 %891, %v838
    %v893 = vpop.permute.xlu0 %892
    %v895 = vmul.f32 %v661, %v863
    %v896 = vmul.f32 %v662, %v868
    %v897 = vmul.f32 %v663, %v873
    %v898 = vmul.f32 %v664, %v878
    %v899 = vmul.f32 %v665, %v883
    %v900 = vmul.f32 %v666, %v888
    %v901 = vmul.f32 %v667, %v893
    %903 = vset.pattern.permute.xlu0 0
    %904 = vperm.xlu0 %903, %v853
    %v905 = vpop.permute.xlu0 %904
    %908 = vset.pattern.permute.xlu0 0
    %909 = vperm.xlu0 %908, %v854
    %v910 = vpop.permute.xlu0 %909
    %913 = vset.pattern.permute.xlu0 0
    %914 = vperm.xlu0 %913, %v855
    %v915 = vpop.permute.xlu0 %914
    %918 = vset.pattern.permute.xlu0 0
    %919 = vperm.xlu0 %918, %v856
    %v920 = vpop.permute.xlu0 %919
    %923 = vset.pattern.permute.xlu0 0
    %924 = vperm.xlu0 %923, %v857
    %v925 = vpop.permute.xlu0 %924
    %928 = vset.pattern.permute.xlu0 0
    %929 = vperm.xlu0 %928, %v858
    %v930 = vpop.permute.xlu0 %929
    %933 = vset.pattern.permute.xlu0 0
    %934 = vperm.xlu0 %933, %v859
    %v935 = vpop.permute.xlu0 %934
    %v937 = vadd.f32 %v895, %v905
    %v938 = vadd.f32 %v896, %v910
    %v939 = vadd.f32 %v897, %v915
    %v940 = vadd.f32 %v898, %v920
    %v941 = vadd.f32 %v899, %v925
    %v942 = vadd.f32 %v900, %v930
    %v943 = vadd.f32 %v901, %v935
    %v944 = vmin.f32 %v937, 0.0
    %v945 = vmin.f32 %v938, 0.0
    %v946 = vmin.f32 %v939, 0.0
    %v947 = vmin.f32 %v940, 0.0
    %v948 = vmin.f32 %v941, 0.0
    %v949 = vmin.f32 %v942, 0.0
    %v950 = vmin.f32 %v943, 0.0
    %v951 = vmul.f32 %v944, 1.442695
    %v952 = vpow.pop %v951
    %v953 = vmul.f32 %v945, 1.442695
    %v954 = vpow.pop %v953
    %v955 = vmul.f32 %v946, 1.442695
    %v956 = vpow.pop %v955
    %v957 = vmul.f32 %v947, 1.442695
    %v958 = vpow.pop %v957
    %v959 = vmul.f32 %v948, 1.442695
    %v960 = vpow.pop %v959
    %v961 = vmul.f32 %v949, 1.442695
    %v962 = vpow.pop %v961
    %v963 = vmul.f32 %v950, 1.442695
    %v964 = vpow.pop %v963
    %v965 = vsub.f32 %v952, 1.0
    %v966 = vsub.f32 %v954, 1.0
    %v967 = vsub.f32 %v956, 1.0
    %v968 = vsub.f32 %v958, 1.0
    %v969 = vsub.f32 %v960, 1.0
    %v970 = vsub.f32 %v962, 1.0
    %v971 = vsub.f32 %v964, 1.0
    %v972 = vmul.f32 %v965, 1.6732632
    %v973 = vmul.f32 %v966, 1.6732632
    %v974 = vmul.f32 %v967, 1.6732632
    %v975 = vmul.f32 %v968, 1.6732632
    %v976 = vmul.f32 %v969, 1.6732632
    %v977 = vmul.f32 %v970, 1.6732632
    %v978 = vmul.f32 %v971, 1.6732632
    %vm979 = vcmp.gt.f32.partialorder %v937, 0.0
    %vm980 = vcmp.gt.f32.partialorder %v938, 0.0
    %vm981 = vcmp.gt.f32.partialorder %v939, 0.0
    %vm982 = vcmp.gt.f32.partialorder %v940, 0.0
    %vm983 = vcmp.gt.f32.partialorder %v941, 0.0
    %vm984 = vcmp.gt.f32.partialorder %v942, 0.0
    %vm985 = vcmp.gt.f32.partialorder %v943, 0.0
    %v986 = vsel %vm979, %v937, %v972
    %v987 = vsel %vm980, %v938, %v973
    %v988 = vsel %vm981, %v939, %v974
    %v989 = vsel %vm982, %v940, %v975
    %v990 = vsel %vm983, %v941, %v976
    %v991 = vsel %vm984, %v942, %v977
    %v992 = vsel %vm985, %v943, %v978
    %v993 = vmul.f32 %v986, 1.050701
    %v994 = vmul.f32 %v987, 1.050701
    %v995 = vmul.f32 %v988, 1.050701
    %v996 = vmul.f32 %v989, 1.050701
    %v997 = vmul.f32 %v990, 1.050701
    %v998 = vmul.f32 %v991, 1.050701
    %v999 = vmul.f32 %v992, 1.050701
    %1000 = vst [vmem:[#allocation5] sm:$0xff] %v993
    %1001 = vst [vmem:[#allocation5 + $0x8] sm:$0xff] %v994
    %1002 = vst [vmem:[#allocation5 + $0x10] sm:$0xff] %v995
    %1003 = vst [vmem:[#allocation5 + $0x18] sm:$0xff] %v996
    %1004 = vst [vmem:[#allocation5 + $0x20] sm:$0xff] %v997
    %1005 = vst [vmem:[#allocation5 + $0x28] sm:$0xff] %v998
    %1006 = vst [vmem:[#allocation5 + $0x30] sm:$0x3] %v999
    // Predicated region
    $region30: #{tpu_custom_call.1} parent=1 // pred_check
      _
    $region31: #{tpu_custom_call.1} parent=1 // pred_check_branch
      %1008 = sbr.rel (0) target = $region33
    $region32: #{tpu_custom_call.1} parent=1 // pred_region
      %1010 = vsyncadd [#allocation4], 0
      %s1011 = sshll.u32 [#allocation5], 4
      %s1012 = int_to_ptr.vmem [resolvable:$true] %s1011
      %s1013 = sshll.u32 %s6, 4
      %s1014 = int_to_ptr.hbm [resolvable:$true] %s1013
      %1019 = dma.vmem_to_hbm [thread:$0]  %s1012, 896, %s1014, [#allocation4], 128, 128, 8
    $region33: #{tpu_custom_call.1} parent=1 // pred_fallthru
      _
    // Predicated region
    $region34: #{tpu_custom_call.1} parent=1 // pred_check
      _
    $region35: #{tpu_custom_call.1} parent=1 // pred_check_branch
      %1021 = sbr.rel (0) target = $region37
    $region36: #{tpu_custom_call.1} parent=1 // pred_region
      %1023 = dma.done [#allocation4], 896
    $region37: #{tpu_custom_call.1} parent=1 // pred_fallthru
      _
    %1024 = vsyncpa [#allocation3], 1
    %1025 = vsyncpa [#allocation4], 1

</llo_original>
